<compile_context>
chip_gen: v5e
topology: v5e:2x2
jax: 0.10.0
libtpu: 0.0.40
codegen_flags: <defaults>
</compile_context>

<pallas_src>
import jax
import jax.numpy as jnp
from jax import lax
from jax.experimental import pallas as pl
from jax.experimental.pallas import tpu as pltpu

KERNEL_SIZE = 5
DILATION = 1                         # multiplying by dilation == 1 is a no-op
PAD = (KERNEL_SIZE - 1) * DILATION   # 4


def _im2col(x_pad, T):
    """x_pad: (T+PAD, C) -> (T, K*C) causal im2col slab (tap-major columns)."""
    return jnp.concatenate([x_pad[k:k + T, :] for k in range(KERNEL_SIZE)],
                           axis=-1)


def causal_conv_block_kernel(x_ref, w1_ref, b1_ref, w2_ref, b2_ref, o_ref):
    """B_blk batch elements per grid step.

    x_ref:  (B_blk, T, C)   input (unpadded)
    w1_ref: (K*C, C) bf16   layer1 weights, row index = (tap k, c_in), col = c_out
    b1_ref: (1, C)   f32    layer1 bias
    w2_ref: (K*C, C) bf16   layer2 weights
    b2_ref: (1, C)   f32    layer2 bias
    o_ref:  (B_blk, T, C)   output
    """
    B_blk, T, C = o_ref.shape
    zpad = jnp.zeros((PAD, C), jnp.bfloat16)

    # ---- layer 1: one fused bf16 matmul for the whole batch block ----
    slabs = []
    for b in range(B_blk):
        xb = x_ref[b].astype(jnp.bfloat16)              # (T, C)
        xp = jnp.concatenate([zpad, xb], axis=0)        # (T+PAD, C) causal pad
        slabs.append(_im2col(xp, T))                    # (T, K*C)
    slab1 = jnp.concatenate(slabs, axis=0)              # (B_blk*T, K*C)

    h = jnp.dot(slab1, w1_ref[...], preferred_element_type=jnp.float32)
    h = jnp.maximum(h + b1_ref[...], 0.0)               # (B_blk*T, C) f32
    # (torch's trailing-pad slice positions are simply never computed, and the
    #  * dilation (== 1) multiply is a no-op)

    # ---- layer 2: same fused form; activations never leave vregs ----
    slabs2 = []
    for b in range(B_blk):
        hb = h[b * T:(b + 1) * T, :].astype(jnp.bfloat16)   # (T, C)
        hp = jnp.concatenate([zpad, hb], axis=0)            # (T+PAD, C)
        slabs2.append(_im2col(hp, T))                       # (T, K*C)
    slab2 = jnp.concatenate(slabs2, axis=0)                 # (B_blk*T, K*C)

    y = jnp.dot(slab2, w2_ref[...], preferred_element_type=jnp.float32)
    y = jnp.maximum(y + b2_ref[...], 0.0)                   # (B_blk*T, C) f32

    for b in range(B_blk):
        o_ref[b] = y[b * T:(b + 1) * T, :].astype(o_ref.dtype)


@jax.jit
def causal_conv_block(x, w1, b1, w2, b2):
    """x: (B, T, C) f32.  w*: torch Conv1d weights (C_out, C_in, K), b*: (C,)."""
    B, T, C = x.shape
    KC = KERNEL_SIZE * C

    # Stack several batch elements per grid step (bigger MXU M dimension).
    B_blk = 1
    for cand in (8, 4, 2, 1):
        if B % cand == 0:
            B_blk = cand
            break
    # NOTE(v7x): for realistic B this still leaves >= 2 parallel grid steps so
    # both TensorCores get work; at tiny B a single fatter step wins on 1-TC chips.

    # Fused im2col weights: (C_out, C_in, K) -> (K, C_in, C_out) -> (K*C_in, C_out),
    # pre-cast to bf16 for the MXU (accumulation stays f32).
    w1_f = jnp.transpose(w1, (2, 1, 0)).reshape(KC, C).astype(jnp.bfloat16)
    w2_f = jnp.transpose(w2, (2, 1, 0)).reshape(KC, C).astype(jnp.bfloat16)
    b1_r = b1.reshape(1, C).astype(jnp.float32)
    b2_r = b2.reshape(1, C).astype(jnp.float32)

    return pl.pallas_call(
        causal_conv_block_kernel,
        out_shape=jax.ShapeDtypeStruct((B, T, C), x.dtype),
        grid_spec=pltpu.PrefetchScalarGridSpec(
            num_scalar_prefetch=0,
            grid=(B // B_blk,),
            in_specs=[
                pl.BlockSpec((B_blk, T, C), lambda i: (i, 0, 0)),   # x (no pre-pad)
                pl.BlockSpec((KC, C), lambda i: (0, 0)),            # w1 (fused im2col)
                pl.BlockSpec((1, C), lambda i: (0, 0)),             # b1
                pl.BlockSpec((KC, C), lambda i: (0, 0)),            # w2 (fused im2col)
                pl.BlockSpec((1, C), lambda i: (0, 0)),             # b2
            ],
            out_specs=pl.BlockSpec((B_blk, T, C), lambda i: (i, 0, 0)),
        ),
        compiler_params=pltpu.CompilerParams(
            dimension_semantics=("parallel",)),
    )(x, w1_f, b1_r, w2_f, b2_r)


def causal_conv_block_ref(x, w1, b1, w2, b2):
    """Pure-JAX f32 reference mirroring the torch forward exactly."""
    T = x.shape[1]
    xc = jnp.transpose(x, (0, 2, 1))  # (B, C, T) == x.permute(0, 2, 1)

    def conv1d(inp, w, b):
        out = lax.conv_general_dilated(
            inp, w, window_strides=(1,), padding=[(PAD, PAD)],
            dimension_numbers=("NCH", "OIH", "NCH"))
        return out + b[None, :, None]

    h = jnp.maximum(conv1d(xc, w1, b1), 0.0)[:, :, :T] * DILATION
    y = jnp.maximum(conv1d(h, w2, b2), 0.0)[:, :, :T] * DILATION
    return jnp.transpose(y, (0, 2, 1))  # back to (B, T, C)


if __name__ == "__main__":
    B, T, C = 2, 16, 32  # model_dim = 32

    key = jax.random.PRNGKey(0)
    kx, k1w, k1b, k2w, k2b = jax.random.split(key, 5)

    # Deterministic parameter init (torch Conv1d shapes: (C_out, C_in, K), (C_out,))
    fan_in = C * KERNEL_SIZE
    bound = 1.0 / (fan_in ** 0.5)
    w1 = jax.random.uniform(k1w, (C, C, KERNEL_SIZE), jnp.float32, -bound, bound)
    b1 = jax.random.uniform(k1b, (C,), jnp.float32, -bound, bound)
    w2 = jax.random.uniform(k2w, (C, C, KERNEL_SIZE), jnp.float32, -bound, bound)
    b2 = jax.random.uniform(k2b, (C,), jnp.float32, -bound, bound)

    x = jax.random.normal(kx, (B, T, C), jnp.float32)

    out = jax.block_until_ready(causal_conv_block(x, w1, b1, w2, b2))
    ref = causal_conv_block_ref(x, w1, b1, w2, b2)

    assert out.shape == (B, T, C)
    # bf16 MXU inputs -> compare to the f32 reference with a slightly looser tolerance.
    assert jnp.allclose(out, ref, atol=5e-2, rtol=5e-2), "mismatch vs reference"

    print("KERNEL_OK")
</pallas_src>

<mosaic_0001>
module attributes {stable_mosaic.version = 11 : i64} {
  func.func @causal_conv_block_kernel(%arg0: i32, %arg1: memref<2x16x32xf32, #tpu.memory_space<vmem>>, %arg2: memref<160x32xbf16, #tpu.memory_space<vmem>>, %arg3: memref<1x32xf32, #tpu.memory_space<vmem>>, %arg4: memref<160x32xbf16, #tpu.memory_space<vmem>>, %arg5: memref<1x32xf32, #tpu.memory_space<vmem>>, %arg6: memref<2x16x32xf32, #tpu.memory_space<vmem>>) attributes {dimension_semantics = [#tpu.dimension_semantics<parallel>], iteration_bounds = array<i64: 1>, scalar_prefetch = 0 : i64, scratch_operands = 0 : i64, tpu.core_type = #tpu.core_type<tc>, window_params = [{transform_indices = @transform_0, window_bounds = array<i64: 2, 16, 32>}, {pipeline_mode = #tpu.pipeline_mode<synchronous>, transform_indices = @transform_1, window_bounds = array<i64: 160, 32>}, {pipeline_mode = #tpu.pipeline_mode<synchronous>, transform_indices = @transform_2, window_bounds = array<i64: 1, 32>}, {pipeline_mode = #tpu.pipeline_mode<synchronous>, transform_indices = @transform_3, window_bounds = array<i64: 160, 32>}, {pipeline_mode = #tpu.pipeline_mode<synchronous>, transform_indices = @transform_4, window_bounds = array<i64: 1, 32>}, {transform_indices = @transform_5, window_bounds = array<i64: 2, 16, 32>}]} {
    %cst = arith.constant 0.000000e+00 : bf16
    %0 = vector.broadcast %cst : bf16 to vector<4x32xbf16>
    %c0 = arith.constant 0 : index
    %c0_0 = arith.constant 0 : index
    %c0_1 = arith.constant 0 : index
    %1 = vector.load %arg1[%c0, %c0_0, %c0_1] : memref<2x16x32xf32, #tpu.memory_space<vmem>>, vector<1x16x32xf32>
    %2 = vector.shape_cast %1 : vector<1x16x32xf32> to vector<16x32xf32>
    %3 = arith.truncf %2 : vector<16x32xf32> to vector<16x32xbf16>
    %4 = tpu.concatenate %0, %3 in 0 : vector<4x32xbf16>, vector<16x32xbf16> -> vector<20x32xbf16>
    %5 = vector.extract_strided_slice %4 {offsets = [0, 0], sizes = [16, 32], strides = [1, 1]} : vector<20x32xbf16> to vector<16x32xbf16>
    %6 = vector.extract_strided_slice %4 {offsets = [1, 0], sizes = [16, 32], strides = [1, 1]} : vector<20x32xbf16> to vector<16x32xbf16>
    %7 = vector.extract_strided_slice %4 {offsets = [2, 0], sizes = [16, 32], strides = [1, 1]} : vector<20x32xbf16> to vector<16x32xbf16>
    %8 = vector.extract_strided_slice %4 {offsets = [3, 0], sizes = [16, 32], strides = [1, 1]} : vector<20x32xbf16> to vector<16x32xbf16>
    %9 = vector.extract_strided_slice %4 {offsets = [4, 0], sizes = [16, 32], strides = [1, 1]} : vector<20x32xbf16> to vector<16x32xbf16>
    %10 = tpu.concatenate %5, %6, %7, %8, %9 in 1 : vector<16x32xbf16>, vector<16x32xbf16>, vector<16x32xbf16>, vector<16x32xbf16>, vector<16x32xbf16> -> vector<16x160xbf16>
    %c1 = arith.constant 1 : index
    %c0_2 = arith.constant 0 : index
    %c0_3 = arith.constant 0 : index
    %11 = vector.load %arg1[%c1, %c0_2, %c0_3] : memref<2x16x32xf32, #tpu.memory_space<vmem>>, vector<1x16x32xf32>
    %12 = vector.shape_cast %11 : vector<1x16x32xf32> to vector<16x32xf32>
    %13 = arith.truncf %12 : vector<16x32xf32> to vector<16x32xbf16>
    %14 = tpu.concatenate %0, %13 in 0 : vector<4x32xbf16>, vector<16x32xbf16> -> vector<20x32xbf16>
    %15 = vector.extract_strided_slice %14 {offsets = [0, 0], sizes = [16, 32], strides = [1, 1]} : vector<20x32xbf16> to vector<16x32xbf16>
    %16 = vector.extract_strided_slice %14 {offsets = [1, 0], sizes = [16, 32], strides = [1, 1]} : vector<20x32xbf16> to vector<16x32xbf16>
    %17 = vector.extract_strided_slice %14 {offsets = [2, 0], sizes = [16, 32], strides = [1, 1]} : vector<20x32xbf16> to vector<16x32xbf16>
    %18 = vector.extract_strided_slice %14 {offsets = [3, 0], sizes = [16, 32], strides = [1, 1]} : vector<20x32xbf16> to vector<16x32xbf16>
    %19 = vector.extract_strided_slice %14 {offsets = [4, 0], sizes = [16, 32], strides = [1, 1]} : vector<20x32xbf16> to vector<16x32xbf16>
    %20 = tpu.concatenate %15, %16, %17, %18, %19 in 1 : vector<16x32xbf16>, vector<16x32xbf16>, vector<16x32xbf16>, vector<16x32xbf16>, vector<16x32xbf16> -> vector<16x160xbf16>
    %21 = tpu.concatenate %10, %20 in 0 : vector<16x160xbf16>, vector<16x160xbf16> -> vector<32x160xbf16>
    %c0_4 = arith.constant 0 : index
    %c0_5 = arith.constant 0 : index
    %22 = vector.load %arg2[%c0_4, %c0_5] : memref<160x32xbf16, #tpu.memory_space<vmem>>, vector<160x32xbf16>
    %cst_6 = arith.constant dense<0.000000e+00> : vector<32x32xf32>
    %23 = tpu.matmul %21, %22, %cst_6 {dimension_numbers = #tpu.dot_dimension_numbers<[1], [0], [0], [1], [0, 0, 1, 1], [], []>} : vector<32x160xbf16>, vector<160x32xbf16>, vector<32x32xf32> -> vector<32x32xf32>
    %c0_7 = arith.constant 0 : index
    %c0_8 = arith.constant 0 : index
    %24 = vector.load %arg3[%c0_7, %c0_8] : memref<1x32xf32, #tpu.memory_space<vmem>>, vector<1x32xf32>
    %25 = vector.broadcast %24 : vector<1x32xf32> to vector<32x32xf32>
    %26 = arith.addf %23, %25 : vector<32x32xf32>
    %cst_9 = arith.constant 0.000000e+00 : f32
    %27 = vector.broadcast %cst_9 : f32 to vector<32x32xf32>
    %28 = arith.maximumf %26, %27 : vector<32x32xf32>
    %29 = vector.extract_strided_slice %28 {offsets = [0, 0], sizes = [16, 32], strides = [1, 1]} : vector<32x32xf32> to vector<16x32xf32>
    %30 = arith.truncf %29 : vector<16x32xf32> to vector<16x32xbf16>
    %31 = tpu.concatenate %0, %30 in 0 : vector<4x32xbf16>, vector<16x32xbf16> -> vector<20x32xbf16>
    %32 = vector.extract_strided_slice %31 {offsets = [0, 0], sizes = [16, 32], strides = [1, 1]} : vector<20x32xbf16> to vector<16x32xbf16>
    %33 = vector.extract_strided_slice %31 {offsets = [1, 0], sizes = [16, 32], strides = [1, 1]} : vector<20x32xbf16> to vector<16x32xbf16>
    %34 = vector.extract_strided_slice %31 {offsets = [2, 0], sizes = [16, 32], strides = [1, 1]} : vector<20x32xbf16> to vector<16x32xbf16>
    %35 = vector.extract_strided_slice %31 {offsets = [3, 0], sizes = [16, 32], strides = [1, 1]} : vector<20x32xbf16> to vector<16x32xbf16>
    %36 = vector.extract_strided_slice %31 {offsets = [4, 0], sizes = [16, 32], strides = [1, 1]} : vector<20x32xbf16> to vector<16x32xbf16>
    %37 = tpu.concatenate %32, %33, %34, %35, %36 in 1 : vector<16x32xbf16>, vector<16x32xbf16>, vector<16x32xbf16>, vector<16x32xbf16>, vector<16x32xbf16> -> vector<16x160xbf16>
    %38 = vector.extract_strided_slice %28 {offsets = [16, 0], sizes = [16, 32], strides = [1, 1]} : vector<32x32xf32> to vector<16x32xf32>
    %39 = arith.truncf %38 : vector<16x32xf32> to vector<16x32xbf16>
    %40 = tpu.concatenate %0, %39 in 0 : vector<4x32xbf16>, vector<16x32xbf16> -> vector<20x32xbf16>
    %41 = vector.extract_strided_slice %40 {offsets = [0, 0], sizes = [16, 32], strides = [1, 1]} : vector<20x32xbf16> to vector<16x32xbf16>
    %42 = vector.extract_strided_slice %40 {offsets = [1, 0], sizes = [16, 32], strides = [1, 1]} : vector<20x32xbf16> to vector<16x32xbf16>
    %43 = vector.extract_strided_slice %40 {offsets = [2, 0], sizes = [16, 32], strides = [1, 1]} : vector<20x32xbf16> to vector<16x32xbf16>
    %44 = vector.extract_strided_slice %40 {offsets = [3, 0], sizes = [16, 32], strides = [1, 1]} : vector<20x32xbf16> to vector<16x32xbf16>
    %45 = vector.extract_strided_slice %40 {offsets = [4, 0], sizes = [16, 32], strides = [1, 1]} : vector<20x32xbf16> to vector<16x32xbf16>
    %46 = tpu.concatenate %41, %42, %43, %44, %45 in 1 : vector<16x32xbf16>, vector<16x32xbf16>, vector<16x32xbf16>, vector<16x32xbf16>, vector<16x32xbf16> -> vector<16x160xbf16>
    %47 = tpu.concatenate %37, %46 in 0 : vector<16x160xbf16>, vector<16x160xbf16> -> vector<32x160xbf16>
    %c0_10 = arith.constant 0 : index
    %c0_11 = arith.constant 0 : index
    %48 = vector.load %arg4[%c0_10, %c0_11] : memref<160x32xbf16, #tpu.memory_space<vmem>>, vector<160x32xbf16>
    %cst_12 = arith.constant dense<0.000000e+00> : vector<32x32xf32>
    %49 = tpu.matmul %47, %48, %cst_12 {dimension_numbers = #tpu.dot_dimension_numbers<[1], [0], [0], [1], [0, 0, 1, 1], [], []>} : vector<32x160xbf16>, vector<160x32xbf16>, vector<32x32xf32> -> vector<32x32xf32>
    %c0_13 = arith.constant 0 : index
    %c0_14 = arith.constant 0 : index
    %50 = vector.load %arg5[%c0_13, %c0_14] : memref<1x32xf32, #tpu.memory_space<vmem>>, vector<1x32xf32>
    %51 = vector.broadcast %50 : vector<1x32xf32> to vector<32x32xf32>
    %52 = arith.addf %49, %51 : vector<32x32xf32>
    %cst_15 = arith.constant 0.000000e+00 : f32
    %53 = vector.broadcast %cst_15 : f32 to vector<32x32xf32>
    %54 = arith.maximumf %52, %53 : vector<32x32xf32>
    %55 = vector.extract_strided_slice %54 {offsets = [0, 0], sizes = [16, 32], strides = [1, 1]} : vector<32x32xf32> to vector<16x32xf32>
    %c0_16 = arith.constant 0 : index
    %c0_17 = arith.constant 0 : index
    %c0_18 = arith.constant 0 : index
    %56 = vector.load %arg6[%c0_16, %c0_17, %c0_18] : memref<2x16x32xf32, #tpu.memory_space<vmem>>, vector<1x16x32xf32>
    %57 = vector.shape_cast %56 : vector<1x16x32xf32> to vector<16x32xf32>
    %58 = vector.shape_cast %55 : vector<16x32xf32> to vector<1x16x32xf32>
    tpu.vector_store %arg6[%c0_16, %c0_17, %c0_18], %58 {strides = array<i32>} : memref<2x16x32xf32, #tpu.memory_space<vmem>>, vector<1x16x32xf32>,
    %59 = vector.extract_strided_slice %54 {offsets = [16, 0], sizes = [16, 32], strides = [1, 1]} : vector<32x32xf32> to vector<16x32xf32>
    %c1_19 = arith.constant 1 : index
    %c0_20 = arith.constant 0 : index
    %c0_21 = arith.constant 0 : index
    %60 = vector.load %arg6[%c1_19, %c0_20, %c0_21] : memref<2x16x32xf32, #tpu.memory_space<vmem>>, vector<1x16x32xf32>
    %61 = vector.shape_cast %60 : vector<1x16x32xf32> to vector<16x32xf32>
    %62 = vector.shape_cast %59 : vector<16x32xf32> to vector<1x16x32xf32>
    tpu.vector_store %arg6[%c1_19, %c0_20, %c0_21], %62 {strides = array<i32>} : memref<2x16x32xf32, #tpu.memory_space<vmem>>, vector<1x16x32xf32>,
    return
  }
  func.func @transform_0(%arg0: i32) -> (i32, i32, i32) {
    %c0_i32 = arith.constant 0 : i32
    %c0_i32_0 = arith.constant 0 : i32
    %c0_i32_1 = arith.constant 0 : i32
    return %arg0, %c0_i32, %c0_i32_0 : i32, i32, i32
  }
  func.func @transform_1(%arg0: i32) -> (i32, i32) {
    %c0_i32 = arith.constant 0 : i32
    %c0_i32_0 = arith.constant 0 : i32
    %c0_i32_1 = arith.constant 0 : i32
    return %c0_i32, %c0_i32_0 : i32, i32
  }
  func.func @transform_2(%arg0: i32) -> (i32, i32) {
    %c0_i32 = arith.constant 0 : i32
    %c0_i32_0 = arith.constant 0 : i32
    %c0_i32_1 = arith.constant 0 : i32
    return %c0_i32, %c0_i32_0 : i32, i32
  }
  func.func @transform_3(%arg0: i32) -> (i32, i32) {
    %c0_i32 = arith.constant 0 : i32
    %c0_i32_0 = arith.constant 0 : i32
    %c0_i32_1 = arith.constant 0 : i32
    return %c0_i32, %c0_i32_0 : i32, i32
  }
  func.func @transform_4(%arg0: i32) -> (i32, i32) {
    %c0_i32 = arith.constant 0 : i32
    %c0_i32_0 = arith.constant 0 : i32
    %c0_i32_1 = arith.constant 0 : i32
    return %c0_i32, %c0_i32_0 : i32, i32
  }
  func.func @transform_5(%arg0: i32) -> (i32, i32, i32) {
    %c0_i32 = arith.constant 0 : i32
    %c0_i32_0 = arith.constant 0 : i32
    %c0_i32_1 = arith.constant 0 : i32
    return %arg0, %c0_i32, %c0_i32_0 : i32, i32, i32
  }
}

</mosaic_0001>

<llo_original>
// kernel: causal_conv_block.1
$region0: #{causal_conv_block.1}
  #allocation0 [shape = 'u32[]', space=smem, size = 0x4, offset = 0x4, fixed_abs, tag = 'smem constant byte address 0x4 - core index']
  #allocation1 [shape = 'u32[72,128]{1,0:T(1,128)}', space=vmem, size = 0x9000, scoped, tag = 'internal scratch']
  %s0 = inlined_call_operand.vmem [shape: f32[2,16,32], index: 0, kind: input, shape index: {}]
  %s1 = inlined_call_operand.vmem [shape: bf16[160,32], index: 1, kind: input, shape index: {}]
  %s2 = inlined_call_operand.vmem [shape: f32[1,32], index: 2, kind: input, shape index: {}]
  %s3 = inlined_call_operand.vmem [shape: bf16[160,32], index: 3, kind: input, shape index: {}]
  %s4 = inlined_call_operand.vmem [shape: f32[1,32], index: 4, kind: input, shape index: {}]
  %s5 = inlined_call_operand.hbm [shape: f32[2,16,32], index: 5, kind: output, shape index: {}]
  %s6 = sld [smem:[#allocation0]]
  $region30: #{causal_conv_block.1} parent=0
    _
  %s8 = ssub.s32 1, %s6
  %s9 = scalar_select 0, %s8, %s6
  $region1: #{causal_conv_block.1} parent=0
    #allocation2 [shape = 'u8[16384]{0}', space=vmem, size = 0x4000, scoped, tag = 'output window, operand 0, single buffered']
    #allocation3 [shape = 's32[1]{0}', space=sflag, size = 0x4, scoped, tag = 'scoped memory for causal_conv_block.1']
    %10 = vsyncpa [#allocation3], 0
    // Predicated region
    $region2: #{causal_conv_block.1} parent=1 // pred_check
      _
    $region3: #{causal_conv_block.1} parent=1 // pred_check_branch
      %12 = sbr.rel (0) target = $region5
    $region4: #{causal_conv_block.1} parent=1 // pred_region
      _
    $region5: #{causal_conv_block.1} parent=1 // pred_fallthru
      _
    // Predicated region
    $region6: #{causal_conv_block.1} parent=1 // pred_check
      _
    $region7: #{causal_conv_block.1} parent=1 // pred_check_branch
      %14 = sbr.rel (0) target = $region9
    $region8: #{causal_conv_block.1} parent=1 // pred_region
      _
    $region9: #{causal_conv_block.1} parent=1 // pred_fallthru
      _
    // Predicated region
    $region10: #{causal_conv_block.1} parent=1 // pred_check
      _
    $region11: #{causal_conv_block.1} parent=1 // pred_check_branch
      %16 = sbr.rel (0) target = $region13
    $region12: #{causal_conv_block.1} parent=1 // pred_region
      _
    $region13: #{causal_conv_block.1} parent=1 // pred_fallthru
      _
    // Predicated region
    $region14: #{causal_conv_block.1} parent=1 // pred_check
      _
    $region15: #{causal_conv_block.1} parent=1 // pred_check_branch
      %18 = sbr.rel (0) target = $region17
    $region16: #{causal_conv_block.1} parent=1 // pred_region
      _
    $region17: #{causal_conv_block.1} parent=1 // pred_fallthru
      _
    // Predicated region
    $region18: #{causal_conv_block.1} parent=1 // pred_check
      _
    $region19: #{causal_conv_block.1} parent=1 // pred_check_branch
      %20 = sbr.rel (0) target = $region21
    $region20: #{causal_conv_block.1} parent=1 // pred_region
      _
    $region21: #{causal_conv_block.1} parent=1 // pred_fallthru
      _
    %v22 = vld [vmem:[%s0] sm:$0xff]
    %v23 = vld [vmem:[%s0 + $0x8] sm:$0xff]
    %v24 = vpack.c.bf16 %v22, %v22
    %v25 = vpack.c.bf16 %v23, %v23
    %v28 = vunpack.c.l.b16 %v24
    %v29 = vunpack.c.l.b16 %v25
    %v30 = vpack.c.b16 %v29, %v28
    %v31 = vrot.slane %v30, 6
    %vm32 = vcmask 1041408
    %v35 = vsel %vm32, 0, %v31
    %vm36 = vsmask.f32 7424
    %v37 = vshrl.u32 %v35, 16
    %v39 = vshll.u32 %v35, 16
    %v41 = vrot.slane %v39, 1
    %v42 = vor.u32 %v37, %v41
    %v43 = vshll.u32 %v31, 16
    %v45 = vrot.slane %v43, 1
    %v46 = vsel %vm36, %v42, %v45
    %47 = vrot.lane.b32.xlu0 %v46, 32
    %v48 = vpop.permute.xlu0 %47
    %vm50 = vcmask 1046528
    %v51 = vrot.slane %v35, 1
    %v52 = vrot.slane %v31, 1
    %v53 = vsel %vm50, %v51, %v52
    %54 = vrot.lane.b32.xlu0 %v53, 64
    %v55 = vpop.permute.xlu0 %54
    %vm56 = vsmask.f32 6400
    %v57 = vrot.slane %v37, 1
    %v58 = vrot.slane %v39, 2
    %v59 = vor.u32 %v57, %v58
    %v60 = vshrl.u32 %v31, 16
    %v62 = vrot.slane %v60, 1
    %v63 = vrot.slane %v43, 2
    %v64 = vor.u32 %v62, %v63
    %v65 = vsel %vm56, %v59, %v64
    %66 = vrot.lane.b32.xlu0 %v65, 96
    %v67 = vpop.permute.xlu0 %66
    %vm68 = vcmask 1045504
    %v69 = vrot.slane %v35, 2
    %v70 = vrot.slane %v31, 2
    %v71 = vsel %vm68, %v69, %v70
    %vm72 = vcmask 261120
    %v74 = vsel %vm72, %v35, %v48
    %vm75 = vcmask 523264
    %v77 = vsel %vm75, %v74, %v55
    %vm78 = vcmask 785408
    %v80 = vsel %vm78, %v77, %v67
    %s82 = scalar_lea.vmem %s0, 16
    %v83 = vld [vmem:[%s82] sm:$0xff]
    %v84 = vld [vmem:[%s82 + $0x8] sm:$0xff]
    %v85 = vpack.c.bf16 %v83, %v83
    %v86 = vpack.c.bf16 %v84, %v84
    %v89 = vunpack.c.l.b16 %v85
    %v90 = vunpack.c.l.b16 %v86
    %v91 = vpack.c.b16 %v90, %v89
    %v92 = vrot.slane %v91, 6
    %v94 = vsel %vm32, 0, %v92
    %v95 = vshrl.u32 %v94, 16
    %v97 = vshll.u32 %v94, 16
    %v99 = vrot.slane %v97, 1
    %v100 = vor.u32 %v95, %v99
    %v101 = vshll.u32 %v92, 16
    %v103 = vrot.slane %v101, 1
    %v104 = vsel %vm36, %v100, %v103
    %105 = vrot.lane.b32.xlu0 %v104, 32
    %v106 = vpop.permute.xlu0 %105
    %v108 = vrot.slane %v94, 1
    %v109 = vrot.slane %v92, 1
    %v110 = vsel %vm50, %v108, %v109
    %111 = vrot.lane.b32.xlu0 %v110, 64
    %v112 = vpop.permute.xlu0 %111
    %v113 = vrot.slane %v95, 1
    %v114 = vrot.slane %v97, 2
    %v115 = vor.u32 %v113, %v114
    %v116 = vshrl.u32 %v92, 16
    %v118 = vrot.slane %v116, 1
    %v119 = vrot.slane %v101, 2
    %v120 = vor.u32 %v118, %v119
    %v121 = vsel %vm56, %v115, %v120
    %122 = vrot.lane.b32.xlu0 %v121, 96
    %v123 = vpop.permute.xlu0 %122
    %v124 = vrot.slane %v94, 2
    %v125 = vrot.slane %v92, 2
    %v126 = vsel %vm68, %v124, %v125
    %v128 = vsel %vm72, %v94, %v106
    %v130 = vsel %vm75, %v128, %v112
    %v132 = vsel %vm78, %v130, %v123
    %v134 = vld [vmem:[%s1] sm:$0xf]
    %v135 = vld [vmem:[%s1 + $0x4] sm:$0xf]
    %v136 = vld [vmem:[%s1 + $0x8] sm:$0xf]
    %v137 = vld [vmem:[%s1 + $0xc] sm:$0xf]
    %v138 = vld [vmem:[%s1 + $0x10] sm:$0xf]
    %v139 = vld [vmem:[%s1 + $0x14] sm:$0xf]
    %v140 = vld [vmem:[%s1 + $0x18] sm:$0xf]
    %v141 = vld [vmem:[%s1 + $0x1c] sm:$0xf]
    %v142 = vld [vmem:[%s1 + $0x20] sm:$0xf]
    %v143 = vld [vmem:[%s1 + $0x24] sm:$0xf]
    %v144 = vld [vmem:[%s1 + $0x28] sm:$0xf]
    %v145 = vld [vmem:[%s1 + $0x2c] sm:$0xf]
    %v146 = vld [vmem:[%s1 + $0x30] sm:$0xf]
    %v147 = vld [vmem:[%s1 + $0x34] sm:$0xf]
    %v148 = vld [vmem:[%s1 + $0x38] sm:$0xf]
    %v149 = vld [vmem:[%s1 + $0x3c] sm:$0xf]
    %v150 = vld [vmem:[%s1 + $0x40] sm:$0xf]
    %v151 = vld [vmem:[%s1 + $0x44] sm:$0xf]
    %v152 = vld [vmem:[%s1 + $0x48] sm:$0xf]
    %v153 = vld [vmem:[%s1 + $0x4c] sm:$0xf]
    %v154 = vld [vmem:[%s2] sm:$0x1]
    %v156 = vperm.slane %v154, 0
    %v178 = vunpack.c.l.b16 %v134
    %v179 = vunpack.c.l.b16 %v135
    %v180 = vunpack.c.l.b16 %v136
    %v181 = vunpack.c.l.b16 %v137
    %v182 = vunpack.c.l.b16 %v138
    %v183 = vunpack.c.l.b16 %v139
    %v184 = vunpack.c.l.b16 %v140
    %v185 = vunpack.c.l.b16 %v141
    %v186 = vunpack.c.l.b16 %v142
    %v187 = vunpack.c.l.b16 %v143
    %v188 = vunpack.c.l.b16 %v144
    %v189 = vunpack.c.l.b16 %v145
    %v190 = vunpack.c.l.b16 %v146
    %v191 = vunpack.c.l.b16 %v147
    %v192 = vunpack.c.l.b16 %v148
    %v193 = vunpack.c.l.b16 %v149
    %v194 = vunpack.c.l.b16 %v150
    %v195 = vunpack.c.l.b16 %v151
    %v196 = vunpack.c.l.b16 %v152
    %v197 = vunpack.c.l.b16 %v153
    %v198 = vpack.c.b16 %v179, %v178
    %v199 = vpack.c.b16 %v181, %v180
    %v200 = vpack.c.b16 %v183, %v182
    %v201 = vpack.c.b16 %v185, %v184
    %v202 = vpack.c.b16 %v187, %v186
    %v203 = vpack.c.b16 %v189, %v188
    %v204 = vpack.c.b16 %v191, %v190
    %v205 = vpack.c.b16 %v193, %v192
    %v206 = vpack.c.b16 %v195, %v194
    %v207 = vpack.c.b16 %v197, %v196
    %v219 = vsel %vm72, %v71, 0
    %v222 = vsel %vm72, %v126, 0
    %224 = vmatpush.bf16.msra.mxu0 %v205
    %225 = vmatpush.bf16.msra.mxu0 %v204
    %226 = vmatpush.bf16.msra.mxu0 %v203
    %227 = vmatpush.bf16.msra.mxu0 %v202
    %228 = vmatpush.bf16.msra.mxu0 %v201
    %229 = vmatpush.bf16.msra.mxu0 %v200
    %230 = vmatpush.bf16.msra.mxu0 %v199
    %231 = vmatpush.bf16.msra.mxu0 %v198
    %232 = vmatmul.bf16.gmra.mxu0 %v80
    %v233 = vpop.f32.mrf.mxu0
    %v234 = vadd.f32 %v156, %v233
    %v235 = vpop.f32.mrf.mxu0
    %v236 = vadd.f32 %v156, %v235
    %237 = vmatmul.bf16.gmra.mxu0 %v132
    %v238 = vpop.f32.mrf.mxu0
    %v239 = vadd.f32 %v156, %v238
    %v240 = vpop.f32.mrf.mxu0
    %v241 = vadd.f32 %v156, %v240
    %242 = vdwg.mxu0
    %243 = vmatpush.bf16.msra.mxu0 0
    %244 = vmatpush.bf16.msra.mxu0 0
    %245 = vmatpush.bf16.msra.mxu0 0
    %246 = vmatpush.bf16.msra.mxu0 0
    %247 = vmatpush.bf16.msra.mxu0 0
    %248 = vmatpush.bf16.msra.mxu0 0
    %249 = vmatpush.bf16.msra.mxu0 %v207
    %250 = vmatpush.bf16.msra.mxu0 %v206
    %251 = vmatmul.bf16.gmra.mxu0 %v219
    %v252 = vpop.f32.mrf.mxu0
    %v253 = vadd.f32 %v234, %v252
    %v254 = vpop.f32.mrf.mxu0
    %v255 = vadd.f32 %v236, %v254
    %256 = vmatmul.bf16.gmra.mxu0 %v222
    %v257 = vpop.f32.mrf.mxu0
    %v258 = vadd.f32 %v239, %v257
    %v259 = vpop.f32.mrf.mxu0
    %v260 = vadd.f32 %v241, %v259
    %261 = vdwg.mxu0
    %v262 = vmax.f32 %v253, 0.0
    %v263 = vmax.f32 %v255, 0.0
    %v264 = vmax.f32 %v258, 0.0
    %v265 = vmax.f32 %v260, 0.0
    %v266 = vpack.c.bf16 %v262, %v262
    %v267 = vpack.c.bf16 %v263, %v263
    %v270 = vunpack.c.l.b16 %v266
    %v271 = vunpack.c.l.b16 %v267
    %v272 = vpack.c.b16 %v271, %v270
    %v273 = vrot.slane %v272, 6
    %v275 = vsel %vm32, 0, %v273
    %v276 = vshrl.u32 %v275, 16
    %v278 = vshll.u32 %v275, 16
    %v280 = vrot.slane %v278, 1
    %v281 = vor.u32 %v276, %v280
    %v282 = vshll.u32 %v273, 16
    %v284 = vrot.slane %v282, 1
    %v285 = vsel %vm36, %v281, %v284
    %286 = vrot.lane.b32.xlu0 %v285, 32
    %v287 = vpop.permute.xlu0 %286
    %v289 = vrot.slane %v275, 1
    %v290 = vrot.slane %v273, 1
    %v291 = vsel %vm50, %v289, %v290
    %292 = vrot.lane.b32.xlu0 %v291, 64
    %v293 = vpop.permute.xlu0 %292
    %v294 = vrot.slane %v276, 1
    %v295 = vrot.slane %v278, 2
    %v296 = vor.u32 %v294, %v295
    %v297 = vshrl.u32 %v273, 16
    %v299 = vrot.slane %v297, 1
    %v300 = vrot.slane %v282, 2
    %v301 = vor.u32 %v299, %v300
    %v302 = vsel %vm56, %v296, %v301
    %303 = vrot.lane.b32.xlu0 %v302, 96
    %v304 = vpop.permute.xlu0 %303
    %v305 = vrot.slane %v275, 2
    %v306 = vrot.slane %v273, 2
    %v307 = vsel %vm68, %v305, %v306
    %v309 = vsel %vm72, %v275, %v287
    %v311 = vsel %vm75, %v309, %v293
    %v313 = vsel %vm78, %v311, %v304
    %v315 = vpack.c.bf16 %v264, %v264
    %v316 = vpack.c.bf16 %v265, %v265
    %v319 = vunpack.c.l.b16 %v315
    %v320 = vunpack.c.l.b16 %v316
    %v321 = vpack.c.b16 %v320, %v319
    %v322 = vrot.slane %v321, 6
    %v324 = vsel %vm32, 0, %v322
    %v325 = vshrl.u32 %v324, 16
    %v327 = vshll.u32 %v324, 16
    %v329 = vrot.slane %v327, 1
    %v330 = vor.u32 %v325, %v329
    %v331 = vshll.u32 %v322, 16
    %v333 = vrot.slane %v331, 1
    %v334 = vsel %vm36, %v330, %v333
    %335 = vrot.lane.b32.xlu0 %v334, 32
    %v336 = vpop.permute.xlu0 %335
    %v338 = vrot.slane %v324, 1
    %v339 = vrot.slane %v322, 1
    %v340 = vsel %vm50, %v338, %v339
    %341 = vrot.lane.b32.xlu0 %v340, 64
    %v342 = vpop.permute.xlu0 %341
    %v343 = vrot.slane %v325, 1
    %v344 = vrot.slane %v327, 2
    %v345 = vor.u32 %v343, %v344
    %v346 = vshrl.u32 %v322, 16
    %v348 = vrot.slane %v346, 1
    %v349 = vrot.slane %v331, 2
    %v350 = vor.u32 %v348, %v349
    %v351 = vsel %vm56, %v345, %v350
    %352 = vrot.lane.b32.xlu0 %v351, 96
    %v353 = vpop.permute.xlu0 %352
    %v354 = vrot.slane %v324, 2
    %v355 = vrot.slane %v322, 2
    %v356 = vsel %vm68, %v354, %v355
    %v358 = vsel %vm72, %v324, %v336
    %v360 = vsel %vm75, %v358, %v342
    %v362 = vsel %vm78, %v360, %v353
    %v364 = vld [vmem:[%s3] sm:$0xf]
    %v365 = vld [vmem:[%s3 + $0x4] sm:$0xf]
    %v366 = vld [vmem:[%s3 + $0x8] sm:$0xf]
    %v367 = vld [vmem:[%s3 + $0xc] sm:$0xf]
    %v368 = vld [vmem:[%s3 + $0x10] sm:$0xf]
    %v369 = vld [vmem:[%s3 + $0x14] sm:$0xf]
    %v370 = vld [vmem:[%s3 + $0x18] sm:$0xf]
    %v371 = vld [vmem:[%s3 + $0x1c] sm:$0xf]
    %v372 = vld [vmem:[%s3 + $0x20] sm:$0xf]
    %v373 = vld [vmem:[%s3 + $0x24] sm:$0xf]
    %v374 = vld [vmem:[%s3 + $0x28] sm:$0xf]
    %v375 = vld [vmem:[%s3 + $0x2c] sm:$0xf]
    %v376 = vld [vmem:[%s3 + $0x30] sm:$0xf]
    %v377 = vld [vmem:[%s3 + $0x34] sm:$0xf]
    %v378 = vld [vmem:[%s3 + $0x38] sm:$0xf]
    %v379 = vld [vmem:[%s3 + $0x3c] sm:$0xf]
    %v380 = vld [vmem:[%s3 + $0x40] sm:$0xf]
    %v381 = vld [vmem:[%s3 + $0x44] sm:$0xf]
    %v382 = vld [vmem:[%s3 + $0x48] sm:$0xf]
    %v383 = vld [vmem:[%s3 + $0x4c] sm:$0xf]
    %v384 = vld [vmem:[%s4] sm:$0x1]
    %v386 = vperm.slane %v384, 0
    %v408 = vunpack.c.l.b16 %v364
    %v409 = vunpack.c.l.b16 %v365
    %v410 = vunpack.c.l.b16 %v366
    %v411 = vunpack.c.l.b16 %v367
    %v412 = vunpack.c.l.b16 %v368
    %v413 = vunpack.c.l.b16 %v369
    %v414 = vunpack.c.l.b16 %v370
    %v415 = vunpack.c.l.b16 %v371
    %v416 = vunpack.c.l.b16 %v372
    %v417 = vunpack.c.l.b16 %v373
    %v418 = vunpack.c.l.b16 %v374
    %v419 = vunpack.c.l.b16 %v375
    %v420 = vunpack.c.l.b16 %v376
    %v421 = vunpack.c.l.b16 %v377
    %v422 = vunpack.c.l.b16 %v378
    %v423 = vunpack.c.l.b16 %v379
    %v424 = vunpack.c.l.b16 %v380
    %v425 = vunpack.c.l.b16 %v381
    %v426 = vunpack.c.l.b16 %v382
    %v427 = vunpack.c.l.b16 %v383
    %v428 = vpack.c.b16 %v409, %v408
    %v429 = vpack.c.b16 %v411, %v410
    %v430 = vpack.c.b16 %v413, %v412
    %v431 = vpack.c.b16 %v415, %v414
    %v432 = vpack.c.b16 %v417, %v416
    %v433 = vpack.c.b16 %v419, %v418
    %v434 = vpack.c.b16 %v421, %v420
    %v435 = vpack.c.b16 %v423, %v422
    %v436 = vpack.c.b16 %v425, %v424
    %v437 = vpack.c.b16 %v427, %v426
    %v449 = vsel %vm72, %v307, 0
    %v452 = vsel %vm72, %v356, 0
    %454 = vmatpush.bf16.msra.mxu0 %v435
    %455 = vmatpush.bf16.msra.mxu0 %v434
    %456 = vmatpush.bf16.msra.mxu0 %v433
    %457 = vmatpush.bf16.msra.mxu0 %v432
    %458 = vmatpush.bf16.msra.mxu0 %v431
    %459 = vmatpush.bf16.msra.mxu0 %v430
    %460 = vmatpush.bf16.msra.mxu0 %v429
    %461 = vmatpush.bf16.msra.mxu0 %v428
    %462 = vmatmul.bf16.gmra.mxu0 %v313
    %v463 = vpop.f32.mrf.mxu0
    %v464 = vadd.f32 %v386, %v463
    %v465 = vpop.f32.mrf.mxu0
    %v466 = vadd.f32 %v386, %v465
    %467 = vmatmul.bf16.gmra.mxu0 %v362
    %v468 = vpop.f32.mrf.mxu0
    %v469 = vadd.f32 %v386, %v468
    %v470 = vpop.f32.mrf.mxu0
    %v471 = vadd.f32 %v386, %v470
    %472 = vdwg.mxu0
    %473 = vmatpush.bf16.msra.mxu0 0
    %474 = vmatpush.bf16.msra.mxu0 0
    %475 = vmatpush.bf16.msra.mxu0 0
    %476 = vmatpush.bf16.msra.mxu0 0
    %477 = vmatpush.bf16.msra.mxu0 0
    %478 = vmatpush.bf16.msra.mxu0 0
    %479 = vmatpush.bf16.msra.mxu0 %v437
    %480 = vmatpush.bf16.msra.mxu0 %v436
    %481 = vmatmul.bf16.gmra.mxu0 %v449
    %v482 = vpop.f32.mrf.mxu0
    %v483 = vadd.f32 %v464, %v482
    %v484 = vpop.f32.mrf.mxu0
    %v485 = vadd.f32 %v466, %v484
    %486 = vmatmul.bf16.gmra.mxu0 %v452
    %v487 = vpop.f32.mrf.mxu0
    %v488 = vadd.f32 %v469, %v487
    %v489 = vpop.f32.mrf.mxu0
    %v490 = vadd.f32 %v471, %v489
    %491 = vdwg.mxu0
    %v492 = vmax.f32 %v483, 0.0
    %v493 = vmax.f32 %v485, 0.0
    %v494 = vmax.f32 %v488, 0.0
    %v495 = vmax.f32 %v490, 0.0
    %496 = vst.msk [vmem:[#allocation2] sm:$0xff] %vm72, %v492
    %497 = vst.msk [vmem:[#allocation2 + $0x8] sm:$0xff] %vm72, %v493
    %s498 = scalar_lea.vmem [#allocation2], 16
    %499 = vst.msk [vmem:[%s498] sm:$0xff] %vm72, %v494
    %500 = vst.msk [vmem:[%s498 + $0x8] sm:$0xff] %vm72, %v495
    // Predicated region
    $region22: #{causal_conv_block.1} parent=1 // pred_check
      _
    $region23: #{causal_conv_block.1} parent=1 // pred_check_branch
      %502 = sbr.rel (0) target = $region25
    $region24: #{causal_conv_block.1} parent=1 // pred_region
      %504 = vsyncadd [#allocation3], 0
      %s505 = sshll.u32 [#allocation2], 4
      %s506 = int_to_ptr.vmem [resolvable:$true] %s505
      %s507 = sshll.u32 %s5, 4
      %s508 = int_to_ptr.hbm [resolvable:$true] %s507
      %513 = dma.vmem_to_hbm [thread:$0]  %s506, 512, %s508, [#allocation3], 128, 128, 8
    $region25: #{causal_conv_block.1} parent=1 // pred_fallthru
      _
    // Predicated region
    $region26: #{causal_conv_block.1} parent=1 // pred_check
      _
    $region27: #{causal_conv_block.1} parent=1 // pred_check_branch
      %515 = sbr.rel (0) target = $region29
    $region28: #{causal_conv_block.1} parent=1 // pred_region
      %517 = dma.done [#allocation3], 512
    $region29: #{causal_conv_block.1} parent=1 // pred_fallthru
      _
    %518 = vsyncpa [#allocation3], 1

</llo_original>
